<compile_context>
chip_gen: v6e
topology: v6e:2x2x1
jax: 0.10.0
libtpu: 0.0.40
codegen_flags: <defaults>
</compile_context>

<pallas_src>
import jax
import jax.numpy as jnp
from jax.experimental import pallas as pl
from jax.experimental.pallas import tpu as pltpu


# ----------------------------------------------------------------------------
# Path 1: zero-copy identity (output buffer aliases the input buffer).
# ----------------------------------------------------------------------------
def _identity_alias_kernel(x_hbm_ref, o_hbm_ref):
    # The output IS the input buffer (input_output_aliases={0: 0}); there is
    # nothing to compute and nothing to move: zero HBM traffic, zero VMEM.
    del x_hbm_ref, o_hbm_ref


def identity_pallas(x: jax.Array) -> jax.Array:
    """Identity mapping as a Pallas TPU kernel with no data movement."""
    return pl.pallas_call(
        _identity_alias_kernel,
        out_shape=jax.ShapeDtypeStruct(x.shape, x.dtype),
        in_specs=[pl.BlockSpec(memory_space=pl.ANY)],
        out_specs=pl.BlockSpec(memory_space=pl.ANY),
        input_output_aliases={0: 0},
    )(x)


# ----------------------------------------------------------------------------
# Path 2: lane-dense tiled copy (only if a fresh output buffer is required).
# ----------------------------------------------------------------------------
def _identity_copy_kernel(x_ref, o_ref):
    o_ref[...] = x_ref[...]


def _choose_cols(total: int) -> int:
    """Largest lane-dense (multiple-of-128) divisor of `total`, capped at 4096."""
    hi = min(total, 4096)
    for cols in range(hi - hi % 128, 0, -128):
        if cols > 0 and total % cols == 0:
            return cols
    # No multiple-of-128 divisor: fall back to the largest divisor <= 4096.
    for cols in range(hi, 0, -1):
        if total % cols == 0:
            return cols
    return total


def _choose_row_tile(rows: int, cols: int, itemsize: int,
                     target_bytes: int = 2 * 1024 * 1024) -> int:
    """Largest divisor of `rows` keeping a (tr, cols) block near ~2 MiB."""
    max_tr = max(1, min(rows, target_bytes // max(1, cols * itemsize)))
    for tr in range(max_tr, 0, -1):
        if rows % tr == 0:
            return tr
    return 1


def identity_copy_pallas(x: jax.Array) -> jax.Array:
    """Identity mapping that materializes a fresh copy (lane-dense, tiled)."""
    orig_shape = x.shape
    total = int(x.size)
    if total == 0:
        return x

    itemsize = jnp.dtype(x.dtype).itemsize
    cols = _choose_cols(total)            # lane-dense last dim (multiple of 128)
    rows = total // cols
    tr = _choose_row_tile(rows, cols, itemsize)

    x2d = x.reshape(rows, cols)           # row-major collapse: value-preserving
    grid = (rows // tr,)

    out2d = pl.pallas_call(
        _identity_copy_kernel,
        out_shape=jax.ShapeDtypeStruct((rows, cols), x.dtype),
        grid_spec=pltpu.PrefetchScalarGridSpec(
            num_scalar_prefetch=0,
            grid=grid,
            in_specs=[pl.BlockSpec((tr, cols), lambda i: (i, 0))],
            out_specs=pl.BlockSpec((tr, cols), lambda i: (i, 0)),
        ),
        compiler_params=pltpu.CompilerParams(
            dimension_semantics=("parallel",),
            vmem_limit_bytes=32 * 1024 * 1024,
        ),
    )(x2d)

    return out2d.reshape(orig_shape)


if __name__ == "__main__":
    key = jax.random.PRNGKey(0)
    # Small NCHW input consistent with the module (N=2, C=4, H=16, W=16).
    x = jax.random.normal(key, (2, 4, 16, 16), dtype=jnp.float32)

    # Default zero-traffic path.
    y = identity_pallas(x)
    jax.block_until_ready(y)
    assert y.shape == x.shape
    assert y.dtype == x.dtype
    assert bool(jnp.all(y == x))

    # Lane-dense tiled copy path.
    y2 = identity_copy_pallas(x)
    jax.block_until_ready(y2)
    assert y2.shape == x.shape
    assert y2.dtype == x.dtype
    assert bool(jnp.all(y2 == x))

    print("KERNEL_OK")
</pallas_src>

<mosaic_0001>
module attributes {stable_mosaic.version = 11 : i64} {
  func.func @_identity_alias_kernel(%arg0: memref<2x4x16x16xf32, #tpu.memory_space<any>>, %arg1: memref<2x4x16x16xf32, #tpu.memory_space<any>>) attributes {dimension_semantics = [], scalar_prefetch = 0 : i64, scratch_operands = 0 : i64, tpu.core_type = #tpu.core_type<tc>} {
    return
  }
}

</mosaic_0001>

<llo_original>
// kernel: tpu_custom_call.1
$region0: #{tpu_custom_call.1}
  #allocation0 [shape = 'u32[]', space=smem, size = 0x4, offset = 0x4, fixed_abs, tag = 'smem constant byte address 0x4 - core index']
  #allocation1 [shape = 'u32[144,128]{1,0:T(1,128)}', space=vmem, size = 0x12000, scoped, tag = 'internal scratch']
  %s0 = inlined_call_operand.hbm [shape: f32[2,4,16,16], index: 0, kind: input, shape index: {}, may-alias: {0,1}]
  %s1 = inlined_call_operand.hbm [shape: f32[2,4,16,16], index: 1, kind: output, shape index: {}, may-alias: {0,1}]
  %s2 = sld [smem:[#allocation0]]
  $region2: #{tpu_custom_call.1} parent=0
    _
  %s4 = ssub.s32 1, %s2
  %s5 = scalar_select 0, %s4, %s2

</llo_original>
